<compile_context>
chip_gen: v7x
topology: tpu7x:2x2x1
jax: 0.10.0
libtpu: 0.0.40
codegen_flags: <defaults>
</compile_context>

<pallas_src>
import functools

import jax
import jax.numpy as jnp
from jax.experimental import pallas as pl
from jax.experimental.pallas import tpu as pltpu

LANE = 128
FOLD = 64                              # sublane height of the per-core accumulator
TARGET_BLOCK_BYTES = 4 * 1024 * 1024   # ~4 MiB per input block, independent of dtype


def _round_up(x, m):
    return ((x + m - 1) // m) * m


def _tensorcores_per_chip():
    # v7x has 2 TensorCores per chip; v5e/v6e have 1.  Detect conservatively from
    # the device kind; anything unknown falls back to 1 (always correct, just
    # serial), so single-TC chips never pay for a redundant "core" axis.
    try:
        kind = jax.devices()[0].device_kind.lower()
    except Exception:
        return 1
    return 2 if "v7" in kind else 1


def _rec_loss_kernel(p_ref, t_ref, o_ref, *, rows, block_rows, blocks_per_core, fold):
    c = pl.program_id(0)  # core axis (CORE_PARALLEL on v7x, size 1 elsewhere)
    j = pl.program_id(1)  # row-block within this core ("arbitrary" reduction axis)

    @pl.when(j == 0)
    def _():
        o_ref[...] = jnp.zeros_like(o_ref)

    # Rows of this logical grid step that are real data.  Steps past the end of
    # the array (index_map clamps them onto a valid block) get rem <= 0 and
    # contribute exactly 0; the partially-covered last block is masked likewise.
    row_start = (c * blocks_per_core + j) * block_rows
    rem = rows - row_start

    def _fold(sq):
        # (block_rows, 128) -> (fold, 128): fold/8 independent f32 accumulator
        # vregs, so the per-step vadd chain has ILP instead of one long serial
        # dependency.  The expensive cross-lane/sublane reduce happens once in
        # the wrapper, not per step.
        return sq.reshape(block_rows // fold, fold, LANE).sum(axis=0)

    @pl.when(rem >= block_rows)
    def _():
        # Fast path (every block except at most one): no iota / compare / select.
        # Match PyTorch: diff in input dtype, then cast to float32 and square.
        diff = (p_ref[...] - t_ref[...]).astype(jnp.float32)
        o_ref[...] += _fold(diff * diff)

    @pl.when(rem < block_rows)
    def _():
        # Tail (or fully clamped/padded) block: mask rows past the logical end.
        # jnp.where is a true select, so stale/NaN VMEM garbage cannot leak in.
        row_idx = jax.lax.broadcasted_iota(jnp.int32, (block_rows, LANE), 0)
        mask = row_idx < rem
        diff = (p_ref[...] - t_ref[...]).astype(jnp.float32)
        o_ref[...] += _fold(jnp.where(mask, diff * diff, 0.0))


@functools.partial(jax.jit, static_argnames=("block_rows",))
def reconstruction_loss(predictions, targets, *, block_rows=None):
    assert predictions.shape == targets.shape
    p = predictions.reshape(-1)
    t = targets.reshape(-1)
    n = p.shape[0]
    if n == 0:
        return jnp.float32(0.0)

    # Pad (zeros) only up to the 128-lane width: at most 127 elements and a
    # no-op for typical NCHW conv tensors.  Zero-pad contributes 0 to the sum.
    n_pad = _round_up(n, LANE)
    if n_pad != n:
        p = jnp.pad(p, (0, n_pad - n))
        t = jnp.pad(t, (0, n_pad - n))

    rows = n_pad // LANE
    p2 = p.reshape(rows, LANE)
    t2 = t.reshape(rows, LANE)

    p_bytes = jnp.dtype(predictions.dtype).itemsize
    t_bytes = jnp.dtype(targets.dtype).itemsize
    itemsize = max(p_bytes, t_bytes)

    if block_rows is None:
        # Constant block *bytes* across dtypes: 8192 rows f32, 16384 rows bf16.
        block_rows = max(FOLD, (TARGET_BLOCK_BYTES // (LANE * itemsize)) // FOLD * FOLD)
    # Shrink for small inputs so we don't allocate MiB-sized VMEM buffers for a
    # handful of rows; keep a multiple of 8 sublanes.
    block_rows = min(block_rows, _round_up(rows, 8))
    # Fold width: 8 independent accumulator vregs for streaming-sized blocks,
    # plain (8,128) for tiny inputs where the block isn't a multiple of 64.
    fold = FOLD if (block_rows >= FOLD and block_rows % FOLD == 0) else 8

    nblocks = pl.cdiv(rows, block_rows)
    ncores = _tensorcores_per_chip()
    if nblocks < 2:
        ncores = 1  # nothing to split; avoid re-streaming a clamped block
    blocks_per_core = pl.cdiv(nblocks, ncores)
    grid = (ncores, blocks_per_core)

    def in_map(c, j):
        # Clamp so padded grid steps re-read a valid block; their contribution
        # is zeroed in-kernel via rem <= 0.
        return (jnp.minimum(c * blocks_per_core + j, nblocks - 1), 0)

    kernel = functools.partial(
        _rec_loss_kernel,
        rows=rows,
        block_rows=block_rows,
        blocks_per_core=blocks_per_core,
        fold=fold,
    )

    if ncores > 1:
        # Only core_parallel actually changes codegen; guarantees the split
        # lands on v7x's two TensorCores.
        dim_sems = (pltpu.CORE_PARALLEL, pltpu.ARBITRARY)
    else:
        dim_sems = (pltpu.ARBITRARY, pltpu.ARBITRARY)

    partials = pl.pallas_call(
        kernel,
        out_shape=jax.ShapeDtypeStruct((ncores * fold, LANE), jnp.float32),
        grid_spec=pltpu.PrefetchScalarGridSpec(
            num_scalar_prefetch=0,
            grid=grid,
            in_specs=[
                pl.BlockSpec((block_rows, LANE), in_map),
                pl.BlockSpec((block_rows, LANE), in_map),
            ],
            out_specs=pl.BlockSpec((fold, LANE), lambda c, j: (c, 0)),
        ),
        compiler_params=pltpu.CompilerParams(
            dimension_semantics=dim_sems,
            # 2 inputs x 2 pipeline buffers x ~4 MiB + f32 temporaries exceed
            # the 16/32 MiB default scoped VMEM; 48 MiB is safe on v5e/v6e
            # (128 MiB physical) and under v7x's 64 MiB/TC.
            vmem_limit_bytes=48 * 1024 * 1024,
        ),
        cost_estimate=pl.CostEstimate(
            flops=3 * n,
            transcendentals=0,
            bytes_accessed=n * (p_bytes + t_bytes) + ncores * fold * LANE * 4,
        ),
    )(p2, t2)

    # Tiny final reduce of the per-core (fold, 128) lane partials.
    return jnp.sum(partials)


if __name__ == "__main__":
    key = jax.random.PRNGKey(0)
    k1, k2 = jax.random.split(key)

    # NCHW, small shapes consistent with the module: batch=2, channels=4, 16x16.
    predictions = jax.random.normal(k1, (2, 4, 16, 16), dtype=jnp.float32)
    targets = jax.random.normal(k2, (2, 4, 16, 16), dtype=jnp.float32)

    loss = reconstruction_loss(predictions, targets)
    loss = jax.block_until_ready(loss)
    ref = jnp.sum(((predictions - targets).astype(jnp.float32)) ** 2)
    assert jnp.allclose(loss, ref, rtol=1e-5, atol=1e-5), (loss, ref)

    # Second check: multi-block grid with a masked partial tail block
    # (exercises both the unmasked fast path and the pl.when tail path).
    k3, k4 = jax.random.split(k1)
    p_big = jax.random.normal(k3, (4, 8, 32, 40), dtype=jnp.float32)   # n = 40960
    t_big = jax.random.normal(k4, (4, 8, 32, 40), dtype=jnp.float32)
    loss_big = jax.block_until_ready(
        reconstruction_loss(p_big, t_big, block_rows=256))
    ref_big = jnp.sum(((p_big - t_big).astype(jnp.float32)) ** 2)
    assert jnp.allclose(loss_big, ref_big, rtol=1e-5, atol=1e-5), (loss_big, ref_big)

    print("KERNEL_OK")
</pallas_src>

<mosaic_0001>
module attributes {stable_mosaic.version = 11 : i64} {
  func.func @_rec_loss_kernel(%arg0: i32, %arg1: i32, %arg2: memref<16x128xf32, #tpu.memory_space<vmem>>, %arg3: memref<16x128xf32, #tpu.memory_space<vmem>>, %arg4: memref<8x128xf32, #tpu.memory_space<vmem>>) attributes {dimension_semantics = [#tpu.dimension_semantics<arbitrary>, #tpu.dimension_semantics<arbitrary>], iteration_bounds = array<i64: 1, 1>, scalar_prefetch = 0 : i64, scratch_operands = 0 : i64, tpu.core_type = #tpu.core_type<tc>, window_params = [{transform_indices = @transform_0, window_bounds = array<i64: 16, 128>}, {transform_indices = @transform_1, window_bounds = array<i64: 16, 128>}, {transform_indices = @transform_2, window_bounds = array<i64: 8, 128>}]} {
    %c0_i32 = arith.constant 0 : i32
    %0 = arith.cmpi eq, %arg1, %c0_i32 : i32
    %1 = arith.extui %0 : i1 to i32
    %c0_i32_0 = arith.constant 0 : i32
    %2 = arith.cmpi ne, %1, %c0_i32_0 : i32
    scf.if %2 {
      %cst = arith.constant 0.000000e+00 : f32
      %13 = vector.broadcast %cst : f32 to vector<8x128xf32>
      %c0 = arith.constant 0 : index
      %c0_6 = arith.constant 0 : index
      %14 = vector.load %arg4[%c0, %c0_6] : memref<8x128xf32, #tpu.memory_space<vmem>>, vector<8x128xf32>
      tpu.vector_store %arg4[%c0, %c0_6], %13 {strides = array<i32>} : memref<8x128xf32, #tpu.memory_space<vmem>>, vector<8x128xf32>,
    } else {
    }
    %c1_i32 = arith.constant 1 : i32
    %3 = arith.muli %arg0, %c1_i32 : i32
    %4 = arith.addi %3, %arg1 : i32
    %c16_i32 = arith.constant 16 : i32
    %5 = arith.muli %4, %c16_i32 : i32
    %c16_i32_1 = arith.constant 16 : i32
    %6 = arith.subi %c16_i32_1, %5 : i32
    %c16_i32_2 = arith.constant 16 : i32
    %7 = arith.cmpi sge, %6, %c16_i32_2 : i32
    %8 = arith.extui %7 : i1 to i32
    %c0_i32_3 = arith.constant 0 : i32
    %9 = arith.cmpi ne, %8, %c0_i32_3 : i32
    scf.if %9 {
      %c0 = arith.constant 0 : index
      %c0_6 = arith.constant 0 : index
      %13 = vector.load %arg2[%c0, %c0_6] : memref<16x128xf32, #tpu.memory_space<vmem>>, vector<16x128xf32>
      %c0_7 = arith.constant 0 : index
      %c0_8 = arith.constant 0 : index
      %14 = vector.load %arg3[%c0_7, %c0_8] : memref<16x128xf32, #tpu.memory_space<vmem>>, vector<16x128xf32>
      %15 = arith.subf %13, %14 : vector<16x128xf32>
      %c0_9 = arith.constant 0 : index
      %c0_10 = arith.constant 0 : index
      %16 = vector.load %arg4[%c0_9, %c0_10] : memref<8x128xf32, #tpu.memory_space<vmem>>, vector<8x128xf32>
      %17 = arith.mulf %15, %15 : vector<16x128xf32>
      %18 = vector.shape_cast %17 : vector<16x128xf32> to vector<2x8x128xf32>
      %cst = arith.constant dense<0.000000e+00> : vector<8x128xf32>
      %19 = vector.multi_reduction <add>, %18, %cst [0] : vector<2x8x128xf32> to vector<8x128xf32>
      %20 = arith.addf %16, %19 : vector<8x128xf32>
      %c0_11 = arith.constant 0 : index
      %c0_12 = arith.constant 0 : index
      %21 = vector.load %arg4[%c0_11, %c0_12] : memref<8x128xf32, #tpu.memory_space<vmem>>, vector<8x128xf32>
      tpu.vector_store %arg4[%c0_11, %c0_12], %20 {strides = array<i32>} : memref<8x128xf32, #tpu.memory_space<vmem>>, vector<8x128xf32>,
    } else {
    }
    %c16_i32_4 = arith.constant 16 : i32
    %10 = arith.cmpi slt, %6, %c16_i32_4 : i32
    %11 = arith.extui %10 : i1 to i32
    %c0_i32_5 = arith.constant 0 : i32
    %12 = arith.cmpi ne, %11, %c0_i32_5 : i32
    scf.if %12 {
      %13 = tpu.iota {dimensions = array<i32: 0>} : vector<16x128xi32>
      %14 = vector.broadcast %6 : i32 to vector<16x128xi32>
      %15 = arith.cmpi slt, %13, %14 : vector<16x128xi32>
      %c0 = arith.constant 0 : index
      %c0_6 = arith.constant 0 : index
      %16 = vector.load %arg2[%c0, %c0_6] : memref<16x128xf32, #tpu.memory_space<vmem>>, vector<16x128xf32>
      %c0_7 = arith.constant 0 : index
      %c0_8 = arith.constant 0 : index
      %17 = vector.load %arg3[%c0_7, %c0_8] : memref<16x128xf32, #tpu.memory_space<vmem>>, vector<16x128xf32>
      %18 = arith.subf %16, %17 : vector<16x128xf32>
      %c0_9 = arith.constant 0 : index
      %c0_10 = arith.constant 0 : index
      %19 = vector.load %arg4[%c0_9, %c0_10] : memref<8x128xf32, #tpu.memory_space<vmem>>, vector<8x128xf32>
      %20 = arith.mulf %18, %18 : vector<16x128xf32>
      %cst = arith.constant 0.000000e+00 : f32
      %21 = vector.broadcast %cst : f32 to vector<16x128xf32>
      %22 = arith.select %15, %20, %21 : vector<16x128xi1>, vector<16x128xf32>
      %23 = vector.shape_cast %22 : vector<16x128xf32> to vector<2x8x128xf32>
      %cst_11 = arith.constant dense<0.000000e+00> : vector<8x128xf32>
      %24 = vector.multi_reduction <add>, %23, %cst_11 [0] : vector<2x8x128xf32> to vector<8x128xf32>
      %25 = arith.addf %19, %24 : vector<8x128xf32>
      %c0_12 = arith.constant 0 : index
      %c0_13 = arith.constant 0 : index
      %26 = vector.load %arg4[%c0_12, %c0_13] : memref<8x128xf32, #tpu.memory_space<vmem>>, vector<8x128xf32>
      tpu.vector_store %arg4[%c0_12, %c0_13], %25 {strides = array<i32>} : memref<8x128xf32, #tpu.memory_space<vmem>>, vector<8x128xf32>,
    } else {
    }
    return
  }
  func.func @transform_0(%arg0: i32, %arg1: i32) -> (i32, i32) {
    %c1_i32 = arith.constant 1 : i32
    %0 = arith.muli %arg0, %c1_i32 : i32
    %1 = arith.addi %0, %arg1 : i32
    %c0_i32 = arith.constant 0 : i32
    %2 = arith.minsi %1, %c0_i32 : i32
    %c0_i32_0 = arith.constant 0 : i32
    %c0_i32_1 = arith.constant 0 : i32
    return %2, %c0_i32_0 : i32, i32
  }
  func.func @transform_1(%arg0: i32, %arg1: i32) -> (i32, i32) {
    %c1_i32 = arith.constant 1 : i32
    %0 = arith.muli %arg0, %c1_i32 : i32
    %1 = arith.addi %0, %arg1 : i32
    %c0_i32 = arith.constant 0 : i32
    %2 = arith.minsi %1, %c0_i32 : i32
    %c0_i32_0 = arith.constant 0 : i32
    %c0_i32_1 = arith.constant 0 : i32
    return %2, %c0_i32_0 : i32, i32
  }
  func.func @transform_2(%arg0: i32, %arg1: i32) -> (i32, i32) {
    %c0_i32 = arith.constant 0 : i32
    %c0_i32_0 = arith.constant 0 : i32
    return %arg0, %c0_i32 : i32, i32
  }
}

</mosaic_0001>

<llo_original>
// kernel: reconstruction_loss.1
$region0: #{reconstruction_loss.1}
  #allocation0 [shape = 'u32[]', space=smem, size = 0x4, offset = 0x4, fixed_abs, tag = 'smem constant byte address 0x4 - core index']
  #allocation1 [shape = 'u32[144,128]{1,0:T(1,128)}', space=vmem, size = 0x12000, scoped, tag = 'internal scratch']
  %s0 = inlined_call_operand.vmem [shape: f32[16,128], index: 0, kind: input, shape index: {}]
  %s1 = inlined_call_operand.vmem [shape: f32[16,128], index: 1, kind: input, shape index: {}]
  %s2 = inlined_call_operand.vmem [shape: f32[8,128], index: 2, kind: output, shape index: {}]
  %s3 = sld [smem:[#allocation0]]
  $region30: #{reconstruction_loss.1} parent=0
    _
  %s5 = ssub.s32 1, %s3
  %s6 = scalar_select 0, %s5, %s3
  // Predicated region
  $region2: #{reconstruction_loss.1} parent=0 // pred_check
    _
  $region3: #{reconstruction_loss.1} parent=0 // pred_check_branch
    %8 = sbr.rel (0) target = $region5
  $region4: #{reconstruction_loss.1} parent=0 // pred_region
    %s9 = sadd.s32 0, 0
    %p10 = scmp.lt.s32.totalorder %s9, 0
    %s11 = scalar_select %p10, %s9, 0
    %s12 = smul.u32 2, %s11
    %p13 = scmp.lt.s32.totalorder %s12, 1
    %s14 = scalar_select %p13, %s12, 1
    %s15 = smul.addr %s14, 8
    %s16 = scalar_lea.vmem %s0, %s15
    %s17 = sadd.s32 0, 0
    %p18 = scmp.lt.s32.totalorder %s17, 0
    %s19 = scalar_select %p18, %s17, 0
    %s20 = smul.u32 2, %s19
  $region5: #{reconstruction_loss.1} parent=0 // pred_fallthru
    _
  // Predicated region
  $region6: #{reconstruction_loss.1} parent=0 // pred_check
    _
  $region7: #{reconstruction_loss.1} parent=0 // pred_check_branch
    %22 = sbr.rel (0) target = $region9
  $region8: #{reconstruction_loss.1} parent=0 // pred_region
    %s23 = sadd.s32 0, 0
    %p24 = scmp.lt.s32.totalorder %s23, 0
    %s25 = scalar_select %p24, %s23, 0
    %s26 = smul.u32 2, %s25
    %p27 = scmp.lt.s32.totalorder %s26, 1
    %s28 = scalar_select %p27, %s26, 1
    %s29 = smul.addr %s28, 8
    %s30 = scalar_lea.vmem %s1, %s29
    %s31 = sadd.s32 0, 0
    %p32 = scmp.lt.s32.totalorder %s31, 0
    %s33 = scalar_select %p32, %s31, 0
    %s34 = smul.u32 2, %s33
  $region9: #{reconstruction_loss.1} parent=0 // pred_fallthru
    _
  %s35 = sadd.s32 0, 0
  %p36 = scmp.lt.s32.totalorder %s35, 0
  %s37 = scalar_select %p36, %s35, 0
  %s38 = smul.u32 2, %s37
  %p39 = scmp.lt.s32.totalorder %s38, 1
  %s40 = scalar_select %p39, %s38, 1
  %s41 = smul.addr %s40, 8
  %s42 = scalar_lea.vmem %s0, %s41
  %s43 = sadd.s32 0, 0
  %p44 = scmp.lt.s32.totalorder %s43, 0
  %s45 = scalar_select %p44, %s43, 0
  %s46 = smul.u32 2, %s45
  %p47 = scmp.lt.s32.totalorder %s46, 1
  %s48 = scalar_select %p47, %s46, 1
  %s49 = smul.addr %s48, 8
  %s50 = scalar_lea.vmem %s1, %s49
  %s51 = sadd.s32 0, 0
  %p52 = scmp.lt.s32.totalorder %s51, 0
  %s53 = scalar_select %p52, %s51, 0
  %s54 = smul.u32 2, %s53
  %p55 = scmp.lt.s32.totalorder %s54, 1
  %s56 = scalar_select %p55, %s54, 1
  %s57 = smul.addr %s56, 8
  %s58 = scalar_lea.vmem %s0, %s57
  %s59 = sadd.s32 0, 0
  %p60 = scmp.lt.s32.totalorder %s59, 0
  %s61 = scalar_select %p60, %s59, 0
  %s62 = smul.u32 2, %s61
  %s63 = sadd.s32 0, 0
  %p64 = scmp.lt.s32.totalorder %s63, 0
  %s65 = scalar_select %p64, %s63, 0
  %s66 = smul.u32 2, %s65
  %p67 = scmp.lt.s32.totalorder %s66, 1
  %s68 = scalar_select %p67, %s66, 1
  %s69 = smul.addr %s68, 8
  %s70 = scalar_lea.vmem %s1, %s69
  %s71 = sadd.s32 0, 0
  %p72 = scmp.lt.s32.totalorder %s71, 0
  %s73 = scalar_select %p72, %s71, 0
  %s74 = smul.u32 2, %s73
  %p75 = scmp.eq.s32.totalorder 0, 0
  // Predicated region
  $region10: #{reconstruction_loss.1} parent=0 // pred_check
    %p76 = pneg %p75
  $region11: #{reconstruction_loss.1} parent=0 // pred_check_branch
    %78 = sbr.rel (%p76) target = $region13
  $region12: #{reconstruction_loss.1} parent=0 // pred_region
    %79 = vst [vmem:[%s2] sm:$0xff] 0.0
  $region13: #{reconstruction_loss.1} parent=0 // pred_fallthru
    _
  %s80 = sadd.s32 0, 0
  %s81 = smul.u32 %s80, 16
  %s82 = ssub.s32 16, %s81
  %p83 = scmp.ge.s32.totalorder %s82, 16
  // Predicated region
  $region14: #{reconstruction_loss.1} parent=0 // pred_check
    %p84 = pneg %p83
  $region15: #{reconstruction_loss.1} parent=0 // pred_check_branch
    %86 = sbr.rel (%p84) target = $region17
  $region16: #{reconstruction_loss.1} parent=0 // pred_region
    %v87 = vld [vmem:[%s58] sm:$0xff]
    %v88 = vld [vmem:[%s58 + $0x8] sm:$0xff]
    %v89 = vld [vmem:[%s70] sm:$0xff]
    %v90 = vld [vmem:[%s70 + $0x8] sm:$0xff]
    %v91 = vsub.f32 %v87, %v89
    %v92 = vsub.f32 %v88, %v90
    %v93 = vld [vmem:[%s2] sm:$0xff]
    %v94 = vmul.f32 %v91, %v91
    %v95 = vmul.f32 %v92, %v92
    %v96 = vadd.f32 %v94, %v95
    %v97 = vadd.f32 %v93, %v96
    %98 = vst [vmem:[%s2] sm:$0xff] %v97
  $region17: #{reconstruction_loss.1} parent=0 // pred_fallthru
    _
  %p99 = scmp.lt.s32.totalorder %s82, 16
  // Predicated region
  $region18: #{reconstruction_loss.1} parent=0 // pred_check
    %p100 = pneg %p99
  $region19: #{reconstruction_loss.1} parent=0 // pred_check_branch
    %102 = sbr.rel (%p100) target = $region21
  $region20: #{reconstruction_loss.1} parent=0 // pred_region
    %v103 = vlaneseq
    %v104 = vshrl.u32 %v103, 7
    %v105 = vadd.s32 %v104, 8
    %v106 = vstv %s82
    %vm107 = vcmp.lt.s32.totalorder %v104, %v106
    %vm108 = vcmp.lt.s32.totalorder %v105, %v106
    %v109 = vld [vmem:[%s58] sm:$0xff]
    %v110 = vld [vmem:[%s58 + $0x8] sm:$0xff]
    %v111 = vld [vmem:[%s70] sm:$0xff]
    %v112 = vld [vmem:[%s70 + $0x8] sm:$0xff]
    %v113 = vsub.f32 %v109, %v111
    %v114 = vsub.f32 %v110, %v112
    %v115 = vld [vmem:[%s2] sm:$0xff]
    %v116 = vmul.f32 %v113, %v113
    %v117 = vmul.f32 %v114, %v114
    %v118 = vsel %vm107, %v116, 0.0
    %v119 = vsel %vm108, %v117, 0.0
    %v120 = vadd.f32 %v118, %v119
    %v121 = vadd.f32 %v115, %v120
    %122 = vst [vmem:[%s2] sm:$0xff] %v121
  $region21: #{reconstruction_loss.1} parent=0 // pred_fallthru
    _
  // Predicated region
  $region22: #{reconstruction_loss.1} parent=0 // pred_check
    _
  $region23: #{reconstruction_loss.1} parent=0 // pred_check_branch
    %124 = sbr.rel (0) target = $region25
  $region24: #{reconstruction_loss.1} parent=0 // pred_region
    _
  $region25: #{reconstruction_loss.1} parent=0 // pred_fallthru
    _
  // Predicated region
  $region26: #{reconstruction_loss.1} parent=0 // pred_check
    _
  $region27: #{reconstruction_loss.1} parent=0 // pred_check_branch
    %126 = sbr.rel (0) target = $region29
  $region28: #{reconstruction_loss.1} parent=0 // pred_region
    _
  $region29: #{reconstruction_loss.1} parent=0 // pred_fallthru
    _

</llo_original>
